<compile_context>
chip_gen: v6e
topology: v6e:2x2x1
jax: 0.10.0
libtpu: 0.0.40
codegen_flags: <defaults>
</compile_context>

<pallas_src>
import jax
import jax.numpy as jnp
from jax.experimental import pallas as pl
from jax.experimental.pallas import tpu as pltpu


def _round_up(x: int, m: int) -> int:
    return ((x + m - 1) // m) * m


def _physical_vmem_bytes() -> int:
    try:
        return int(pltpu.get_tpu_info().vmem_capacity_bytes)
    except Exception:
        return 64 * 1024 * 1024          # v7x per-TC (smallest current chip)


def _swiglu_expert_kernel(x_ref, wgu_ref, wd_ref, o_ref, acc_ref):
    # x_ref  : (TM, D)       compute dtype (bf16 by default)
    # wgu_ref: (D, 2*TF)     fused [gate | up] weight tile
    # wd_ref : (TF, D)       down-projection weight tile
    # o_ref  : (TM, D)       output tile (written on the last F step)
    # acc_ref: (TM, D) f32   VMEM accumulator over the F reduction
    k = pl.program_id(1)

    @pl.when(k == 0)
    def _init():
        acc_ref[...] = jnp.zeros_like(acc_ref)

    tf = wd_ref.shape[0]
    x = x_ref[...]
    # Two MXU passes against static 128-aligned halves of the fused tile
    # (ref slices, not value slices -> no (TM, 2*TF) f32 copy/relayout).
    g = jnp.dot(x, wgu_ref[:, :tf], preferred_element_type=jnp.float32)
    u = jnp.dot(x, wgu_ref[:, tf:], preferred_element_type=jnp.float32)
    hidden = (g * jax.nn.sigmoid(g)) * u             # SiLU(gate) * up, in f32
    acc_ref[...] += jnp.dot(hidden.astype(wd_ref.dtype), wd_ref[...],
                            preferred_element_type=jnp.float32)

    @pl.when(k == pl.num_programs(1) - 1)
    def _store():
        o_ref[...] = acc_ref[...].astype(o_ref.dtype)


def prepare_expert_weights(w_gate, w_up, w_down, *,
                           ff_tile: int = 256,
                           compute_dtype=jnp.bfloat16):
    """Hoisted, cacheable weight prep: fuse gate|up per F-tile and cast.

    w_gate, w_up : (D, F)  pre-transposed nn.Linear weights (x @ W)
    w_down       : (F, D)
    Returns (w_gu, wd):
      w_gu : (KF, D, 2*TF)  fused [gate | up] tiles, compute_dtype
      wd   : (F_pad, D)     zero-padded down projection, compute_dtype
    Zero-padded F columns/rows contribute exactly 0 to the reduction.
    """
    D, F = w_gate.shape
    assert w_up.shape == (D, F) and w_down.shape == (F, D)

    TF = max(128, min(_round_up(ff_tile, 128), _round_up(F, 128)))
    F_pad = _round_up(F, TF)
    KF = F_pad // TF
    pf = F_pad - F

    wg = w_gate.astype(compute_dtype)
    wu = w_up.astype(compute_dtype)
    wd = w_down.astype(compute_dtype)
    if pf:
        wg = jnp.pad(wg, ((0, 0), (0, pf)))
        wu = jnp.pad(wu, ((0, 0), (0, pf)))
        wd = jnp.pad(wd, ((0, pf), (0, 0)))

    wg = wg.reshape(D, KF, TF).transpose(1, 0, 2)
    wu = wu.reshape(D, KF, TF).transpose(1, 0, 2)
    w_gu = jnp.concatenate([wg, wu], axis=-1)        # (KF, D, 2*TF)
    return w_gu, wd


def moe_expert_forward(x, w_gu, wd, *,
                       token_tile: int = 512,
                       vmem_limit_bytes=None):
    """SwiGLU expert forward with prepared weights.

    x    : (B, S, D)
    w_gu : (KF, D, 2*TF)  from prepare_expert_weights
    wd   : (F_pad, D)
    Returns (B, S, D) in x.dtype.

    Tile tuning: token_tile=512 / TF=256 targets v7x (64 MiB VMEM, 2 TCs) and
    already doubles v6e throughput vs TM=256; on v6e/v5e (128 MiB VMEM) raise
    token_tile to 768-1024 / 256 respectively if still weight-DMA bound.
    """
    B, S, D = x.shape
    KF, Dw, twoTF = w_gu.shape
    TF = twoTF // 2
    F_pad = KF * TF
    assert Dw == D and wd.shape == (F_pad, D)

    compute_dtype = w_gu.dtype
    out_dtype = x.dtype
    cb = jnp.dtype(compute_dtype).itemsize
    ob = jnp.dtype(out_dtype).itemsize

    # ---- token tiling ------------------------------------------------------
    T = B * S
    sub = max(8, 32 // cb)                 # sublane multiple: 8 f32, 16 bf16
    TM = min(token_tile, _round_up(T, sub))
    if T >= 2 * sub:
        # Keep at least 2 token tiles so the "parallel" axis feeds both v7x TCs.
        TM = min(TM, _round_up(-(-T // 2), sub))
    if TM >= 256:
        TM = (TM // 256) * 256             # full-width MXU M on v6e/v7x
    elif TM >= 128:
        TM = 128
    else:
        TM = _round_up(TM, sub)
    TP = _round_up(T, TM)                  # pad tokens to a TM multiple
    MT = TP // TM

    xt = x.reshape(T, D).astype(compute_dtype)
    if TP != T:
        xt = jnp.pad(xt, ((0, TP - T), (0, 0)))

    # ---- VMEM budget -------------------------------------------------------
    footprint = (2 * TM * D * cb           # x (double-buffered)
                 + 2 * D * twoTF * cb      # fused gate|up tile
                 + 2 * TF * D * cb         # down tile
                 + 2 * TM * D * ob         # output tile
                 + TM * D * 4)             # f32 accumulator scratch
    if vmem_limit_bytes is None:
        phys = _physical_vmem_bytes()
        budget = min(phys - (8 << 20), 100 << 20)
        vmem_limit_bytes = min(budget, max(48 << 20, 2 * footprint))

    cost = pl.CostEstimate(
        flops=6 * TP * D * F_pad,                    # 2*T*D*2F + 2*T*F*D
        transcendentals=TP * F_pad,                  # sigmoid
        bytes_accessed=TP * D * cb + MT * 3 * D * F_pad * cb + TP * D * ob,
    )

    grid_spec = pltpu.PrefetchScalarGridSpec(
        num_scalar_prefetch=0,
        grid=(MT, KF),                               # reduction axis last
        in_specs=[
            # x tile stays resident across the whole F reduction.
            pl.BlockSpec((TM, D), lambda m, k: (m, 0)),
            pl.BlockSpec((pl.Squeezed(), D, twoTF), lambda m, k: (k, 0, 0)),
            pl.BlockSpec((TF, D), lambda m, k: (k, 0)),
        ],
        out_specs=pl.BlockSpec((TM, D), lambda m, k: (m, 0)),
        scratch_shapes=[pltpu.VMEM((TM, D), jnp.float32)],
    )

    out = pl.pallas_call(
        _swiglu_expert_kernel,
        out_shape=jax.ShapeDtypeStruct((TP, D), out_dtype),
        grid_spec=grid_spec,
        compiler_params=pltpu.CompilerParams(
            dimension_semantics=("parallel", "arbitrary"),
            vmem_limit_bytes=int(vmem_limit_bytes),
        ),
        cost_estimate=cost,
    )(xt, w_gu, wd)

    return out[:T].reshape(B, S, D)


def moe_expert_layer(x, w_gate, w_up, w_down, *,
                     ff_tile: int = 256,
                     compute_dtype=jnp.bfloat16,
                     **kwargs):
    """Convenience one-shot wrapper; cache prepare_expert_weights for reuse."""
    w_gu, wd = prepare_expert_weights(w_gate, w_up, w_down,
                                      ff_tile=ff_tile,
                                      compute_dtype=compute_dtype)
    return moe_expert_forward(x, w_gu, wd, **kwargs)


def moe_expert_reference(x, w_gate, w_up, w_down, compute_dtype=jnp.bfloat16):
    """Plain-JAX mirror of the kernel's bf16-compute / f32-accumulate math."""
    B, S, D = x.shape
    xt = x.reshape(B * S, D).astype(compute_dtype)
    g = jnp.dot(xt, w_gate.astype(compute_dtype),
                preferred_element_type=jnp.float32)
    u = jnp.dot(xt, w_up.astype(compute_dtype),
                preferred_element_type=jnp.float32)
    hidden = ((g * jax.nn.sigmoid(g)) * u).astype(compute_dtype)
    out = jnp.dot(hidden, w_down.astype(compute_dtype),
                  preferred_element_type=jnp.float32)
    return out.reshape(B, S, D).astype(x.dtype)


def _make_inputs(key, batch, seq, model_dim, ff_dim):
    kx, kg, ku, kd = jax.random.split(key, 4)
    x = jax.random.normal(kx, (batch, seq, model_dim), dtype=jnp.float32)
    # PyTorch nn.Linear stores weight as (out, in), init U(-1/sqrt(in), ...);
    # build the pre-transposed (in, out) form directly.
    sd = 1.0 / jnp.sqrt(model_dim)
    sf = 1.0 / jnp.sqrt(ff_dim)
    w_gate = jax.random.uniform(kg, (model_dim, ff_dim),
                                minval=-sd, maxval=sd, dtype=jnp.float32)
    w_up = jax.random.uniform(ku, (model_dim, ff_dim),
                              minval=-sd, maxval=sd, dtype=jnp.float32)
    w_down = jax.random.uniform(kd, (ff_dim, model_dim),
                                minval=-sf, maxval=sf, dtype=jnp.float32)
    return x, w_gate, w_up, w_down


if __name__ == "__main__":
    key = jax.random.PRNGKey(0)
    k1, k2 = jax.random.split(key, 2)

    # Case 1: lane-aligned dims; auto tiling gives TM=16, TF=256 -> grid (2, 2)
    # exercising both the parallel token axis and the F-reduction accumulator.
    batch, seq, model_dim, ff_dim = 4, 8, 128, 512
    x, w_gate, w_up, w_down = _make_inputs(k1, batch, seq, model_dim, ff_dim)

    # Hoisted host-side weight fusion: prepare once, reuse across calls.
    w_gu, wd = prepare_expert_weights(w_gate, w_up, w_down, ff_tile=256)
    w_gu, wd = jax.block_until_ready((w_gu, wd))

    out = jax.block_until_ready(moe_expert_forward(x, w_gu, wd))
    ref = moe_expert_reference(x, w_gate, w_up, w_down)
    assert out.shape == (batch, seq, model_dim)
    assert out.dtype == x.dtype
    err1 = float(jnp.max(jnp.abs(out - ref)))
    # bf16 streaming + f32 accumulation => loosened tolerance vs f32-only.
    assert jnp.allclose(out, ref, atol=1e-2, rtol=1e-2), f"mismatch: {err1}"

    # Case 2: awkward sizes — odd token count (token padding) and ff_dim with
    # no 256-divisor (zero-padded F columns) exercise the robustness fixes.
    batch2, seq2, model_dim2, ff_dim2 = 3, 5, 256, 384
    x2, wg2, wu2, wdn2 = _make_inputs(k2, batch2, seq2, model_dim2, ff_dim2)
    w_gu2, wd2 = prepare_expert_weights(wg2, wu2, wdn2, ff_tile=256)
    out2 = jax.block_until_ready(moe_expert_forward(x2, w_gu2, wd2))
    ref2 = moe_expert_reference(x2, wg2, wu2, wdn2)
    assert out2.shape == (batch2, seq2, model_dim2)
    err2 = float(jnp.max(jnp.abs(out2 - ref2)))
    assert jnp.allclose(out2, ref2, atol=1e-2, rtol=1e-2), f"mismatch: {err2}"

    print("KERNEL_OK")
</pallas_src>

<mosaic_0001>
module attributes {stable_mosaic.version = 11 : i64} {
  func.func @_swiglu_expert_kernel(%arg0: i32, %arg1: i32, %arg2: memref<16x128xbf16, #tpu.memory_space<vmem>>, %arg3: memref<1x128x512xbf16, #tpu.memory_space<vmem>>, %arg4: memref<256x128xbf16, #tpu.memory_space<vmem>>, %arg5: memref<16x128xf32, #tpu.memory_space<vmem>>, %arg6: memref<16x128xf32, #tpu.memory_space<vmem>>) attributes {dimension_semantics = [#tpu.dimension_semantics<parallel>, #tpu.dimension_semantics<arbitrary>], iteration_bounds = array<i64: 2, 2>, scalar_prefetch = 0 : i64, scratch_operands = 1 : i64, tpu.core_type = #tpu.core_type<tc>, window_params = [{transform_indices = @transform_0, window_bounds = array<i64: 16, 128>}, {transform_indices = @transform_1, window_bounds = array<i64: 1, 128, 512>}, {transform_indices = @transform_2, window_bounds = array<i64: 256, 128>}, {transform_indices = @transform_3, window_bounds = array<i64: 16, 128>}]} {
    %c0_i32 = arith.constant 0 : i32
    %0 = arith.cmpi eq, %arg1, %c0_i32 : i32
    %1 = arith.extui %0 : i1 to i32
    %c0_i32_0 = arith.constant 0 : i32
    %2 = arith.cmpi ne, %1, %c0_i32_0 : i32
    scf.if %2 {
      %cst_17 = arith.constant 0.000000e+00 : f32
      %26 = vector.broadcast %cst_17 : f32 to vector<16x128xf32>
      %c0_18 = arith.constant 0 : index
      %c0_19 = arith.constant 0 : index
      %27 = vector.load %arg6[%c0_18, %c0_19] : memref<16x128xf32, #tpu.memory_space<vmem>>, vector<16x128xf32>
      tpu.vector_store %arg6[%c0_18, %c0_19], %26 {strides = array<i32>} : memref<16x128xf32, #tpu.memory_space<vmem>>, vector<16x128xf32>,
    } else {
    }
    %c0 = arith.constant 0 : index
    %c0_1 = arith.constant 0 : index
    %3 = vector.load %arg2[%c0, %c0_1] : memref<16x128xbf16, #tpu.memory_space<vmem>>, vector<16x128xbf16>
    %c0_2 = arith.constant 0 : index
    %c0_3 = arith.constant 0 : index
    %c0_4 = arith.constant 0 : index
    %4 = vector.load %arg3[%c0_2, %c0_3, %c0_4] : memref<1x128x512xbf16, #tpu.memory_space<vmem>>, vector<1x128x256xbf16>
    %5 = vector.shape_cast %4 : vector<1x128x256xbf16> to vector<128x256xbf16>
    %cst = arith.constant dense<0.000000e+00> : vector<16x256xf32>
    %6 = tpu.matmul %3, %5, %cst {dimension_numbers = #tpu.dot_dimension_numbers<[1], [0], [0], [1], [0, 0, 1, 1], [], []>} : vector<16x128xbf16>, vector<128x256xbf16>, vector<16x256xf32> -> vector<16x256xf32>
    %c0_5 = arith.constant 0 : index
    %c0_6 = arith.constant 0 : index
    %c256 = arith.constant 256 : index
    %7 = vector.load %arg3[%c0_5, %c0_6, %c256] : memref<1x128x512xbf16, #tpu.memory_space<vmem>>, vector<1x128x256xbf16>
    %8 = vector.shape_cast %7 : vector<1x128x256xbf16> to vector<128x256xbf16>
    %cst_7 = arith.constant dense<0.000000e+00> : vector<16x256xf32>
    %9 = tpu.matmul %3, %8, %cst_7 {dimension_numbers = #tpu.dot_dimension_numbers<[1], [0], [0], [1], [0, 0, 1, 1], [], []>} : vector<16x128xbf16>, vector<128x256xbf16>, vector<16x256xf32> -> vector<16x256xf32>
    %10 = arith.negf %6 : vector<16x256xf32>
    %11 = math.exp %10 : vector<16x256xf32>
    %cst_8 = arith.constant 1.000000e+00 : f32
    %12 = vector.broadcast %cst_8 : f32 to vector<16x256xf32>
    %13 = arith.addf %12, %11 : vector<16x256xf32>
    %14 = arith.divf %12, %13 : vector<16x256xf32>
    %15 = arith.mulf %6, %14 : vector<16x256xf32>
    %16 = arith.mulf %15, %9 : vector<16x256xf32>
    %c0_9 = arith.constant 0 : index
    %c0_10 = arith.constant 0 : index
    %17 = vector.load %arg6[%c0_9, %c0_10] : memref<16x128xf32, #tpu.memory_space<vmem>>, vector<16x128xf32>
    %18 = arith.truncf %16 : vector<16x256xf32> to vector<16x256xbf16>
    %c0_11 = arith.constant 0 : index
    %c0_12 = arith.constant 0 : index
    %19 = vector.load %arg4[%c0_11, %c0_12] : memref<256x128xbf16, #tpu.memory_space<vmem>>, vector<256x128xbf16>
    %cst_13 = arith.constant dense<0.000000e+00> : vector<16x128xf32>
    %20 = tpu.matmul %18, %19, %cst_13 {dimension_numbers = #tpu.dot_dimension_numbers<[1], [0], [0], [1], [0, 0, 1, 1], [], []>} : vector<16x256xbf16>, vector<256x128xbf16>, vector<16x128xf32> -> vector<16x128xf32>
    %21 = arith.addf %17, %20 : vector<16x128xf32>
    %c0_14 = arith.constant 0 : index
    %c0_15 = arith.constant 0 : index
    %22 = vector.load %arg6[%c0_14, %c0_15] : memref<16x128xf32, #tpu.memory_space<vmem>>, vector<16x128xf32>
    tpu.vector_store %arg6[%c0_14, %c0_15], %21 {strides = array<i32>} : memref<16x128xf32, #tpu.memory_space<vmem>>, vector<16x128xf32>,
    %c1_i32 = arith.constant 1 : i32
    %23 = arith.cmpi eq, %arg1, %c1_i32 : i32
    %24 = arith.extui %23 : i1 to i32
    %c0_i32_16 = arith.constant 0 : i32
    %25 = arith.cmpi ne, %24, %c0_i32_16 : i32
    scf.if %25 {
      %c0_17 = arith.constant 0 : index
      %c0_18 = arith.constant 0 : index
      %26 = vector.load %arg6[%c0_17, %c0_18] : memref<16x128xf32, #tpu.memory_space<vmem>>, vector<16x128xf32>
      %c0_19 = arith.constant 0 : index
      %c0_20 = arith.constant 0 : index
      %27 = vector.load %arg5[%c0_19, %c0_20] : memref<16x128xf32, #tpu.memory_space<vmem>>, vector<16x128xf32>
      tpu.vector_store %arg5[%c0_19, %c0_20], %26 {strides = array<i32>} : memref<16x128xf32, #tpu.memory_space<vmem>>, vector<16x128xf32>,
    } else {
    }
    return
  }
  func.func @transform_0(%arg0: i32, %arg1: i32) -> (i32, i32) {
    %c0_i32 = arith.constant 0 : i32
    %c0_i32_0 = arith.constant 0 : i32
    return %arg0, %c0_i32 : i32, i32
  }
  func.func @transform_1(%arg0: i32, %arg1: i32) -> (i32, i32, i32) {
    %c0_i32 = arith.constant 0 : i32
    %c0_i32_0 = arith.constant 0 : i32
    %c0_i32_1 = arith.constant 0 : i32
    return %arg1, %c0_i32, %c0_i32_0 : i32, i32, i32
  }
  func.func @transform_2(%arg0: i32, %arg1: i32) -> (i32, i32) {
    %c0_i32 = arith.constant 0 : i32
    %c0_i32_0 = arith.constant 0 : i32
    return %arg1, %c0_i32 : i32, i32
  }
  func.func @transform_3(%arg0: i32, %arg1: i32) -> (i32, i32) {
    %c0_i32 = arith.constant 0 : i32
    %c0_i32_0 = arith.constant 0 : i32
    return %arg0, %c0_i32 : i32, i32
  }
}

</mosaic_0001>

<llo_original>
// kernel: tpu_custom_call.1
$region0: #{tpu_custom_call.1}
  #allocation0 [shape = 'u32[]', space=smem, size = 0x4, offset = 0x4, fixed_abs, tag = 'smem constant byte address 0x4 - core index']
  #allocation1 [shape = 'u32[144,128]{1,0:T(1,128)}', space=vmem, size = 0x12000, scoped, tag = 'internal scratch']
  #allocation2 [shape = 'f32[16,128]{1,0:T(8,128)}', space=vmem, size = 0x2000, scoped, tag = 'scratch operand']
  %s0 = inlined_call_operand.hbm [shape: bf16[32,128], index: 0, kind: input, shape index: {}]
  %s1 = inlined_call_operand.hbm [shape: bf16[2,128,512], index: 1, kind: input, shape index: {}]
  %s2 = inlined_call_operand.hbm [shape: bf16[512,128], index: 2, kind: input, shape index: {}]
  %s3 = inlined_call_operand.hbm [shape: f32[32,128], index: 3, kind: output, shape index: {}]
  %s4 = sld [smem:[#allocation0]]
  $region65: #{tpu_custom_call.1} parent=0
    _
  %s6 = ssub.s32 1, %s4
  %s7 = scalar_select 0, %s6, %s4
  $region1: #{tpu_custom_call.1} parent=0
    #allocation3 [shape = 'u8[8192]{0}', space=vmem, size = 0x2000, scoped, tag = 'input window, operand 0']
    #allocation4 [shape = 's32[2]{0}', space=sflag, size = 0x8, scoped, tag = 'scoped memory for tpu_custom_call.1']
    #allocation5 [shape = 's32[2]{0}', space=sflag, size = 0x8, scoped, tag = 'scoped memory for tpu_custom_call.1']
    #allocation6 [shape = 'u8[262144]{0}', space=vmem, size = 0x40000, scoped, tag = 'input window, operand 1']
    #allocation7 [shape = 's32[2]{0}', space=sflag, size = 0x8, scoped, tag = 'scoped memory for tpu_custom_call.1']
    #allocation8 [shape = 'u8[131072]{0}', space=vmem, size = 0x20000, scoped, tag = 'input window, operand 2']
    #allocation9 [shape = 'u8[16384]{0}', space=vmem, size = 0x4000, scoped, tag = 'output window, operand 0']
    %8 = vsyncpa [#allocation4], 0
    %s9 = scalar_lea.sflag [#allocation4], 1
    %10 = vsyncpa %s9, 0
    %11 = vsyncpa [#allocation7], 0
    %s12 = scalar_lea.sflag [#allocation7], 1
    %13 = vsyncpa %s12, 0
    %14 = vsyncpa [#allocation5], 0
    %s15 = scalar_lea.sflag [#allocation5], 1
    %16 = vsyncpa %s15, 0
    loop: start=0, step=1, limit=6
    $region2: #{tpu_custom_call.1} parent=1 // loop_pre_header
      _
    $region3: #{tpu_custom_call.1} parent=1 // loop_header
      %s18 = sphi 0, %s22
      %p19 = scmp.ge.s32.totalorder %s18, 6
      %s25 = sphi 0, %s37
      %s26 = sphi 0, %s33
      %s27 = sphi 0, %s25
      %s28 = sphi 0, %s26
      %s29 = sphi 0, %s27
      %s30 = sphi 0, %s28
      %s40 = sphi 0, %s42
      %s43 = sphi 0, %s40
      %s44 = sphi 0, %s43
      %s60 = sphi 0, %s44
      %s66 = sphi 0, %s68
      %s69 = sphi 0, %s66
      %s70 = sphi 0, %s69
      %s86 = sphi 0, %s70
      %s92 = sphi 0, %s94
      %s95 = sphi 0, %s92
      %s96 = sphi 0, %s95
      %s112 = sphi 0, %s96
      %s118 = sphi 0, %s120
      %s121 = sphi 0, %s118
      %s122 = sphi 0, %s121
      %s138 = sphi 0, %s122
    $region4: #{tpu_custom_call.1} parent=1 // loop_header_branch
      %21 = sbr.rel (%p19) target = $region8
    $region5: #{tpu_custom_call.1} parent=1 // loop_body
      %s23 = ssub.s32 %s18, 1
      %s24 = ssub.s32 %s18, 2
      %s31 = sadd.s32 1, %s26
      %p32 = scmp.ge.s32.totalorder %s31, 2
      %s33 = scalar_select %p32, 0, %s31
      %s34 = sadd.s32 1, %s25
      %s35 = scalar_select %p32, %s34, %s25
      %p36 = scmp.ge.s32.totalorder %s35, 2
      %s37 = scalar_select %p36, 0, %s35
      %s38 = ssub.s32 %s25, %s37
      %p39 = scmp.eq.s32.totalorder %s38, 0
      %s41 = sadd.s32 %s40, 1
      %s42 = scalar_select %p39, %s40, %s41
      %p45 = pneg %p39
      %p46 = scmp.eq.s32.totalorder %s18, 3
      %p47 = por %p45, %p46
      %p48 = scmp.ne.s32.totalorder %s40, %s43
      %p49 = scmp.eq.s32.totalorder %s18, 0
      %p50 = por %p48, %p49
      %p51 = scmp.ne.s32.totalorder %s40, %s43
      %p52 = scmp.eq.s32.totalorder %s23, 3
      %p53 = por %p51, %p52
      %p54 = scmp.ne.s32.totalorder %s43, %s44
      %p55 = scmp.eq.s32.totalorder %s23, 0
      %p56 = por %p54, %p55
      %p57 = scmp.ne.s32.totalorder %s43, %s44
      %p58 = scmp.eq.s32.totalorder %s24, 3
      %p59 = por %p57, %p58
      %p61 = scmp.ne.s32.totalorder %s44, %s60
      %p62 = scmp.eq.s32.totalorder %s24, 0
      %p63 = por %p61, %p62
      %s64 = ssub.s32 %s26, %s33
      %p65 = scmp.eq.s32.totalorder %s64, 0
      %s67 = sadd.s32 %s66, 1
      %s68 = scalar_select %p65, %s66, %s67
      %p71 = pneg %p65
      %p72 = scmp.eq.s32.totalorder %s18, 3
      %p73 = por %p71, %p72
      %p74 = scmp.ne.s32.totalorder %s66, %s69
      %p75 = scmp.eq.s32.totalorder %s18, 0
      %p76 = por %p74, %p75
      %p77 = scmp.ne.s32.totalorder %s66, %s69
      %p78 = scmp.eq.s32.totalorder %s23, 3
      %p79 = por %p77, %p78
      %p80 = scmp.ne.s32.totalorder %s69, %s70
      %p81 = scmp.eq.s32.totalorder %s23, 0
      %p82 = por %p80, %p81
      %p83 = scmp.ne.s32.totalorder %s69, %s70
      %p84 = scmp.eq.s32.totalorder %s24, 3
      %p85 = por %p83, %p84
      %p87 = scmp.ne.s32.totalorder %s70, %s86
      %p88 = scmp.eq.s32.totalorder %s24, 0
      %p89 = por %p87, %p88
      %s90 = ssub.s32 %s26, %s33
      %p91 = scmp.eq.s32.totalorder %s90, 0
      %s93 = sadd.s32 %s92, 1
      %s94 = scalar_select %p91, %s92, %s93
      %p97 = pneg %p91
      %p98 = scmp.eq.s32.totalorder %s18, 3
      %p99 = por %p97, %p98
      %p100 = scmp.ne.s32.totalorder %s92, %s95
      %p101 = scmp.eq.s32.totalorder %s18, 0
      %p102 = por %p100, %p101
      %p103 = scmp.ne.s32.totalorder %s92, %s95
      %p104 = scmp.eq.s32.totalorder %s23, 3
      %p105 = por %p103, %p104
      %p106 = scmp.ne.s32.totalorder %s95, %s96
      %p107 = scmp.eq.s32.totalorder %s23, 0
      %p108 = por %p106, %p107
      %p109 = scmp.ne.s32.totalorder %s95, %s96
      %p110 = scmp.eq.s32.totalorder %s24, 3
      %p111 = por %p109, %p110
      %p113 = scmp.ne.s32.totalorder %s96, %s112
      %p114 = scmp.eq.s32.totalorder %s24, 0
      %p115 = por %p113, %p114
      %s116 = ssub.s32 %s25, %s37
      %p117 = scmp.eq.s32.totalorder %s116, 0
      %s119 = sadd.s32 %s118, 1
      %s120 = scalar_select %p117, %s118, %s119
      %p123 = pneg %p117
      %p124 = scmp.eq.s32.totalorder %s18, 3
      %p125 = por %p123, %p124
      %p126 = scmp.ne.s32.totalorder %s118, %s121
      %p127 = scmp.eq.s32.totalorder %s18, 0
      %p128 = por %p126, %p127
      %p129 = scmp.ne.s32.totalorder %s118, %s121
      %p130 = scmp.eq.s32.totalorder %s23, 3
      %p131 = por %p129, %p130
      %p132 = scmp.ne.s32.totalorder %s121, %s122
      %p133 = scmp.eq.s32.totalorder %s23, 0
      %p134 = por %p132, %p133
      %p135 = scmp.ne.s32.totalorder %s121, %s122
      %p136 = scmp.eq.s32.totalorder %s24, 3
      %p137 = por %p135, %p136
      %p139 = scmp.ne.s32.totalorder %s122, %s138
      %p140 = scmp.eq.s32.totalorder %s24, 0
      %p141 = por %p139, %p140
      %p142 = scmp.le.s32.totalorder 1, %s18
      %p143 = scmp.lt.s32.totalorder %s18, 5
      %p144 = pnand %p142, %p143
      %p145 = pneg %p144
      // Predicated region
      $region9: #{tpu_custom_call.1} parent=5 // pred_check
        _
      $region10: #{tpu_custom_call.1} parent=5 // pred_check_branch
        %147 = sbr.rel (%p144) target = $region12
      $region11: #{tpu_custom_call.1} parent=5 // pred_region
        %s148 = ssub.s32 %s18, 1
      $region12: #{tpu_custom_call.1} parent=5 // pred_fallthru
        _
      %p149 = scmp.lt.s32.totalorder %s18, 4
      // Predicated region
      $region13: #{tpu_custom_call.1} parent=5 // pred_check
        %p150 = pneg %p149
      $region14: #{tpu_custom_call.1} parent=5 // pred_check_branch
        %152 = sbr.rel (%p150) target = $region16
      $region15: #{tpu_custom_call.1} parent=5 // pred_region
        // Predicated region
        $region17: #{tpu_custom_call.1} parent=15 // pred_check
          %p153 = pneg %p50
        $region18: #{tpu_custom_call.1} parent=15 // pred_check_branch
          %155 = sbr.rel (%p153) target = $region20
        $region19: #{tpu_custom_call.1} parent=15 // pred_region
          %s156 = sand.u32 %s40, 1
          %s157 = scalar_lea.sflag [#allocation4], %s156
          %s158 = sand.u32 %s40, 1
          %s159 = smul.addr %s158, 8
          %s160 = scalar_lea.vmem [#allocation3], %s159
          %s161 = smul.u32 2, %s25
          %s163 = ssub.s32 128, 128
          %164 = vsyncadd %s157, %s163
          %s165 = smul.addr %s161, 64
          %s166 = scalar_lea.hbm %s0, %s165
          %s167 = sshll.u32 %s160, 4
          %s168 = int_to_ptr.vmem [resolvable:$true] %s167
          %173 = dma.hbm_to_vmem [thread:$0]  %s166, 128, %s168, %s157, 64, 64, 4
        $region20: #{tpu_custom_call.1} parent=15 // pred_fallthru
          _
        // Predicated region
        $region21: #{tpu_custom_call.1} parent=15 // pred_check
          %p174 = pneg %p76
        $region22: #{tpu_custom_call.1} parent=15 // pred_check_branch
          %176 = sbr.rel (%p174) target = $region24
        $region23: #{tpu_custom_call.1} parent=15 // pred_region
          %s177 = sand.u32 %s18, 1
          %s178 = scalar_lea.sflag [#allocation7], %s177
          %s179 = sand.u32 %s66, 1
          %s180 = smul.addr %s179, 256
          %s181 = scalar_lea.vmem [#allocation6], %s180
          %s183 = ssub.s32 4096, 4096
          %184 = vsyncadd %s178, %s183
          %s185 = smul.addr %s26, 64
          %s186 = smul.addr %s185, 64
          %s187 = scalar_lea.hbm %s1, %s186
          %s188 = sshll.u32 %s181, 4
          %s189 = int_to_ptr.vmem [resolvable:$true] %s188
          %194 = dma.hbm_to_vmem [thread:$0]  %s187, 4096, %s189, %s178, 256, 256, 16
        $region24: #{tpu_custom_call.1} parent=15 // pred_fallthru
          _
        // Predicated region
        $region25: #{tpu_custom_call.1} parent=15 // pred_check
          %p195 = pneg %p102
        $region26: #{tpu_custom_call.1} parent=15 // pred_check_branch
          %197 = sbr.rel (%p195) target = $region28
        $region27: #{tpu_custom_call.1} parent=15 // pred_region
          %s198 = sand.u32 %s18, 1
          %s199 = scalar_lea.sflag [#allocation7], %s198
          %s200 = sand.u32 %s92, 1
          %s201 = smul.addr %s200, 128
          %s202 = scalar_lea.vmem [#allocation8], %s201
          %s203 = smul.u32 32, %s26
          %s205 = ssub.s32 2048, 2048
          %206 = vsyncadd %s199, %s205
          %s207 = smul.addr %s203, 64
          %s208 = scalar_lea.hbm %s2, %s207
          %s209 = sshll.u32 %s202, 4
          %s210 = int_to_ptr.vmem [resolvable:$true] %s209
          %215 = dma.hbm_to_vmem [thread:$0]  %s208, 2048, %s210, %s199, 64, 64, 4
        $region28: #{tpu_custom_call.1} parent=15 // pred_fallthru
          _
      $region16: #{tpu_custom_call.1} parent=5 // pred_fallthru
        _
      %p216 = scmp.le.s32.totalorder 1, %s18
      %p217 = scmp.lt.s32.totalorder %s18, 5
      %p218 = pnand %p216, %p217
      %p219 = pneg %p218
      // Predicated region
      $region29: #{tpu_custom_call.1} parent=5 // pred_check
        _
      $region30: #{tpu_custom_call.1} parent=5 // pred_check_branch
        %221 = sbr.rel (%p218) target = $region32
      $region31: #{tpu_custom_call.1} parent=5 // pred_region
        %s222 = ssub.s32 %s18, 1
        %s223 = sand.u32 %s43, 1
        %s224 = scalar_lea.sflag [#allocation4], %s223
        %s225 = sand.u32 %s43, 1
        %s226 = smul.addr %s225, 8
        %s227 = scalar_lea.vmem [#allocation3], %s226
        // Predicated region
        $region33: #{tpu_custom_call.1} parent=31 // pred_check
          %p228 = pneg %p56
        $region34: #{tpu_custom_call.1} parent=31 // pred_check_branch
          %230 = sbr.rel (%p228) target = $region36
        $region35: #{tpu_custom_call.1} parent=31 // pred_region
          %231 = dma.done %s224, 128
        $region36: #{tpu_custom_call.1} parent=31 // pred_fallthru
          _
        %s232 = sand.u32 %s23, 1
        %s233 = scalar_lea.sflag [#allocation7], %s232
        %s234 = sand.u32 %s69, 1
        %s235 = smul.addr %s234, 256
        %s236 = scalar_lea.vmem [#allocation6], %s235
        // Predicated region
        $region37: #{tpu_custom_call.1} parent=31 // pred_check
          %p237 = pneg %p82
        $region38: #{tpu_custom_call.1} parent=31 // pred_check_branch
          %239 = sbr.rel (%p237) target = $region40
        $region39: #{tpu_custom_call.1} parent=31 // pred_region
          %240 = dma.done %s233, 4096
        $region40: #{tpu_custom_call.1} parent=31 // pred_fallthru
          _
        %s241 = sand.u32 %s23, 1
        %s242 = scalar_lea.sflag [#allocation7], %s241
        %s243 = sand.u32 %s95, 1
        %s244 = smul.addr %s243, 128
        %s245 = scalar_lea.vmem [#allocation8], %s244
        // Predicated region
        $region41: #{tpu_custom_call.1} parent=31 // pred_check
          %p246 = pneg %p108
        $region42: #{tpu_custom_call.1} parent=31 // pred_check_branch
          %248 = sbr.rel (%p246) target = $region44
        $region43: #{tpu_custom_call.1} parent=31 // pred_region
          %249 = dma.done %s242, 2048
        $region44: #{tpu_custom_call.1} parent=31 // pred_fallthru
          _
        %s250 = sand.u32 %s43, 1
        %s251 = scalar_lea.sflag [#allocation4], %s250
        %s252 = sand.u32 %s43, 1
        %s253 = smul.addr %s252, 8
        %s254 = scalar_lea.vmem [#allocation3], %s253
        %p255 = pneg %p56
        %p256 = pneg %p53
        %s257 = sand.u32 %s23, 1
        %s258 = scalar_lea.sflag [#allocation7], %s257
        %s259 = sand.u32 %s69, 1
        %s260 = smul.addr %s259, 256
        %s261 = scalar_lea.vmem [#allocation6], %s260
        %p262 = pneg %p82
        %p263 = pneg %p79
        %s264 = sand.u32 %s23, 1
        %s265 = scalar_lea.sflag [#allocation7], %s264
        %s266 = sand.u32 %s95, 1
        %s267 = smul.addr %s266, 128
        %s268 = scalar_lea.vmem [#allocation8], %s267
        %p269 = pneg %p108
        %p270 = pneg %p105
        %p271 = pneg %p134
        %p272 = pneg %p131
        %s273 = sand.u32 %s121, 1
        %s274 = scalar_lea.sflag [#allocation5], %s273
        %s275 = sand.u32 %s121, 1
        %s276 = smul.addr %s275, 16
        %s277 = scalar_lea.vmem [#allocation9], %s276
        %s278 = smul.u32 2, %s27
        %s279 = smul.u32 32, %s28
        %s280 = smul.u32 2, %s27
        %p282 = scmp.eq.s32.totalorder %s28, 0
        // Predicated region
        $region45: #{tpu_custom_call.1} parent=31 // pred_check
          %p283 = pneg %p282
        $region46: #{tpu_custom_call.1} parent=31 // pred_check_branch
          %285 = sbr.rel (%p283) target = $region48
        $region47: #{tpu_custom_call.1} parent=31 // pred_region
          %286 = vst [vmem:[#allocation2] sm:$0xff] 0.0
          %287 = vst [vmem:[#allocation2 + $0x8] sm:$0xff] 0.0
        $region48: #{tpu_custom_call.1} parent=31 // pred_fallthru
          _
        %v288 = vld [vmem:[%s227] sm:$0xf]
        %v289 = vld [vmem:[%s227 + $0x4] sm:$0xf]
        %v290 = vld [vmem:[%s236] sm:$0xff]
        %v291 = vld [vmem:[%s236 + $0x10] sm:$0xff]
        %v292 = vld [vmem:[%s236 + $0x20] sm:$0xff]
        %v293 = vld [vmem:[%s236 + $0x30] sm:$0xff]
        %v294 = vld [vmem:[%s236 + $0x40] sm:$0xff]
        %v295 = vld [vmem:[%s236 + $0x50] sm:$0xff]
        %v296 = vld [vmem:[%s236 + $0x60] sm:$0xff]
        %v297 = vld [vmem:[%s236 + $0x70] sm:$0xff]
        %v298 = vld [vmem:[%s236 + $0x80] sm:$0xff]
        %v299 = vld [vmem:[%s236 + $0x90] sm:$0xff]
        %v300 = vld [vmem:[%s236 + $0xa0] sm:$0xff]
        %v301 = vld [vmem:[%s236 + $0xb0] sm:$0xff]
        %v302 = vld [vmem:[%s236 + $0xc0] sm:$0xff]
        %v303 = vld [vmem:[%s236 + $0xd0] sm:$0xff]
        %v304 = vld [vmem:[%s236 + $0xe0] sm:$0xff]
        %v305 = vld [vmem:[%s236 + $0xf0] sm:$0xff]
        %v308 = vunpack.c.l.b16 %v288
        %v309 = vunpack.c.l.b16 %v289
        %v310 = vpack.c.b16 %v309, %v308
        %v328 = vunpack.c.l.b16 %v290
        %v329 = vunpack.c.h.b16 %v290
        %v330 = vunpack.c.l.b16 %v291
        %v331 = vunpack.c.h.b16 %v291
        %v332 = vunpack.c.l.b16 %v292
        %v333 = vunpack.c.h.b16 %v292
        %v334 = vunpack.c.l.b16 %v293
        %v335 = vunpack.c.h.b16 %v293
        %v336 = vunpack.c.l.b16 %v294
        %v337 = vunpack.c.h.b16 %v294
        %v338 = vunpack.c.l.b16 %v295
        %v339 = vunpack.c.h.b16 %v295
        %v340 = vunpack.c.l.b16 %v296
        %v341 = vunpack.c.h.b16 %v296
        %v342 = vunpack.c.l.b16 %v297
        %v343 = vunpack.c.h.b16 %v297
        %v344 = vunpack.c.l.b16 %v298
        %v345 = vunpack.c.h.b16 %v298
        %v346 = vunpack.c.l.b16 %v299
        %v347 = vunpack.c.h.b16 %v299
        %v348 = vunpack.c.l.b16 %v300
        %v349 = vunpack.c.h.b16 %v300
        %v350 = vunpack.c.l.b16 %v301
        %v351 = vunpack.c.h.b16 %v301
        %v352 = vunpack.c.l.b16 %v302
        %v353 = vunpack.c.h.b16 %v302
        %v354 = vunpack.c.l.b16 %v303
        %v355 = vunpack.c.h.b16 %v303
        %v356 = vunpack.c.l.b16 %v304
        %v357 = vunpack.c.h.b16 %v304
        %v358 = vunpack.c.l.b16 %v305
        %v359 = vunpack.c.h.b16 %v305
        %v360 = vpack.c.b16 %v330, %v328
        %v361 = vpack.c.b16 %v331, %v329
        %v362 = vpack.c.b16 %v334, %v332
        %v363 = vpack.c.b16 %v335, %v333
        %v364 = vpack.c.b16 %v338, %v336
        %v365 = vpack.c.b16 %v339, %v337
        %v366 = vpack.c.b16 %v342, %v340
        %v367 = vpack.c.b16 %v343, %v341
        %v368 = vpack.c.b16 %v346, %v344
        %v369 = vpack.c.b16 %v347, %v345
        %v370 = vpack.c.b16 %v350, %v348
        %v371 = vpack.c.b16 %v351, %v349
        %v372 = vpack.c.b16 %v354, %v352
        %v373 = vpack.c.b16 %v355, %v353
        %v374 = vpack.c.b16 %v358, %v356
        %v375 = vpack.c.b16 %v359, %v357
        %392 = vmatprep.subr.bf16.mxu0 %v375
        %393 = vmatpush1.bf16.msra.mxu0 %v374
        %394 = vmatprep.subr.bf16.mxu0 %v373
        %395 = vmatpush1.bf16.msra.mxu0 %v372
        %396 = vmatprep.subr.bf16.mxu0 %v371
        %397 = vmatpush1.bf16.msra.mxu0 %v370
        %398 = vmatprep.subr.bf16.mxu0 %v369
        %399 = vmatpush1.bf16.msra.mxu0 %v368
        %400 = vmatprep.subr.bf16.mxu0 %v367
        %401 = vmatpush1.bf16.msra.mxu0 %v366
        %402 = vmatprep.subr.bf16.mxu0 %v365
        %403 = vmatpush1.bf16.msra.mxu0 %v364
        %404 = vmatprep.subr.bf16.mxu0 %v363
        %405 = vmatpush1.bf16.msra.mxu0 %v362
        %406 = vmatprep.subr.bf16.mxu0 %v361
        %407 = vmatpush1.bf16.msra.mxu0 %v360
        %408 = vmatprep.subr.bf16.mxu0 0
        %409 = vmatpush2.bf16.msra.mxu0 0
        %410 = vmatprep.subr.bf16.mxu0 0
        %411 = vmatpush2.bf16.msra.mxu0 0
        %412 = vmatprep.subr.bf16.mxu0 0
        %413 = vmatpush2.bf16.msra.mxu0 0
        %414 = vmatprep.subr.bf16.mxu0 0
        %415 = vmatpush2.bf16.msra.mxu0 0
        %416 = vmatprep.subr.bf16.mxu0 0
        %417 = vmatpush2.bf16.msra.mxu0 0
        %418 = vmatprep.subr.bf16.mxu0 0
        %419 = vmatpush2.bf16.msra.mxu0 0
        %420 = vmatprep.subr.bf16.mxu0 0
        %421 = vmatpush2.bf16.msra.mxu0 0
        %422 = vmatprep.subr.bf16.mxu0 0
        %423 = vmatpush2.bf16.msra.mxu0 0
        %424 = vmatprep.mubr.bf16.mxu0 0
        %425 = vmatmul.mubr.bf16.gmra.mxu0 %v310
        %v426 = vpop.f32.mrf.mxu0
        %v427 = vadd.f32 0.0, %v426
        %v428 = vpop.f32.mrf.mxu0
        %v429 = vadd.f32 0.0, %v428
        %v430 = vpop.f32.mrf.mxu0
        %v431 = vadd.f32 0.0, %v430
        %v432 = vpop.f32.mrf.mxu0
        %v433 = vadd.f32 0.0, %v432
        %434 = vdwg.mxu0
        %v435 = vld [vmem:[%s236 + $0x8] sm:$0xff]
        %v436 = vld [vmem:[%s236 + $0x18] sm:$0xff]
        %v437 = vld [vmem:[%s236 + $0x28] sm:$0xff]
        %v438 = vld [vmem:[%s236 + $0x38] sm:$0xff]
        %v439 = vld [vmem:[%s236 + $0x48] sm:$0xff]
        %v440 = vld [vmem:[%s236 + $0x58] sm:$0xff]
        %v441 = vld [vmem:[%s236 + $0x68] sm:$0xff]
        %v442 = vld [vmem:[%s236 + $0x78] sm:$0xff]
        %v443 = vld [vmem:[%s236 + $0x88] sm:$0xff]
        %v444 = vld [vmem:[%s236 + $0x98] sm:$0xff]
        %v445 = vld [vmem:[%s236 + $0xa8] sm:$0xff]
        %v446 = vld [vmem:[%s236 + $0xb8] sm:$0xff]
        %v447 = vld [vmem:[%s236 + $0xc8] sm:$0xff]
        %v448 = vld [vmem:[%s236 + $0xd8] sm:$0xff]
        %v449 = vld [vmem:[%s236 + $0xe8] sm:$0xff]
        %v450 = vld [vmem:[%s236 + $0xf8] sm:$0xff]
        %v467 = vunpack.c.l.b16 %v435
        %v468 = vunpack.c.h.b16 %v435
        %v469 = vunpack.c.l.b16 %v436
        %v470 = vunpack.c.h.b16 %v436
        %v471 = vunpack.c.l.b16 %v437
        %v472 = vunpack.c.h.b16 %v437
        %v473 = vunpack.c.l.b16 %v438
        %v474 = vunpack.c.h.b16 %v438
        %v475 = vunpack.c.l.b16 %v439
        %v476 = vunpack.c.h.b16 %v439
        %v477 = vunpack.c.l.b16 %v440
        %v478 = vunpack.c.h.b16 %v440
        %v479 = vunpack.c.l.b16 %v441
        %v480 = vunpack.c.h.b16 %v441
        %v481 = vunpack.c.l.b16 %v442
        %v482 = vunpack.c.h.b16 %v442
        %v483 = vunpack.c.l.b16 %v443
        %v484 = vunpack.c.h.b16 %v443
        %v485 = vunpack.c.l.b16 %v444
        %v486 = vunpack.c.h.b16 %v444
        %v487 = vunpack.c.l.b16 %v445
        %v488 = vunpack.c.h.b16 %v445
        %v489 = vunpack.c.l.b16 %v446
        %v490 = vunpack.c.h.b16 %v446
        %v491 = vunpack.c.l.b16 %v447
        %v492 = vunpack.c.h.b16 %v447
        %v493 = vunpack.c.l.b16 %v448
        %v494 = vunpack.c.h.b16 %v448
        %v495 = vunpack.c.l.b16 %v449
        %v496 = vunpack.c.h.b16 %v449
        %v497 = vunpack.c.l.b16 %v450
        %v498 = vunpack.c.h.b16 %v450
        %v499 = vpack.c.b16 %v469, %v467
        %v500 = vpack.c.b16 %v470, %v468
        %v501 = vpack.c.b16 %v473, %v471
        %v502 = vpack.c.b16 %v474, %v472
        %v503 = vpack.c.b16 %v477, %v475
        %v504 = vpack.c.b16 %v478, %v476
        %v505 = vpack.c.b16 %v481, %v479
        %v506 = vpack.c.b16 %v482, %v480
        %v507 = vpack.c.b16 %v485, %v483
        %v508 = vpack.c.b16 %v486, %v484
        %v509 = vpack.c.b16 %v489, %v487
        %v510 = vpack.c.b16 %v490, %v488
        %v511 = vpack.c.b16 %v493, %v491
        %v512 = vpack.c.b16 %v494, %v492
        %v513 = vpack.c.b16 %v497, %v495
        %v514 = vpack.c.b16 %v498, %v496
        %531 = vmatprep.subr.bf16.mxu0 %v514
        %532 = vmatpush1.bf16.msra.mxu0 %v513
        %533 = vmatprep.subr.bf16.mxu0 %v512
        %534 = vmatpush1.bf16.msra.mxu0 %v511
        %535 = vmatprep.subr.bf16.mxu0 %v510
        %536 = vmatpush1.bf16.msra.mxu0 %v509
        %537 = vmatprep.subr.bf16.mxu0 %v508
        %538 = vmatpush1.bf16.msra.mxu0 %v507
        %539 = vmatprep.subr.bf16.mxu0 %v506
        %540 = vmatpush1.bf16.msra.mxu0 %v505
        %541 = vmatprep.subr.bf16.mxu0 %v504
        %542 = vmatpush1.bf16.msra.mxu0 %v503
        %543 = vmatprep.subr.bf16.mxu0 %v502
        %544 = vmatpush1.bf16.msra.mxu0 %v501
        %545 = vmatprep.subr.bf16.mxu0 %v500
        %546 = vmatpush1.bf16.msra.mxu0 %v499
        %547 = vmatprep.subr.bf16.mxu0 0
        %548 = vmatpush2.bf16.msra.mxu0 0
        %549 = vmatprep.subr.bf16.mxu0 0
        %550 = vmatpush2.bf16.msra.mxu0 0
        %551 = vmatprep.subr.bf16.mxu0 0
        %552 = vmatpush2.bf16.msra.mxu0 0
        %553 = vmatprep.subr.bf16.mxu0 0
        %554 = vmatpush2.bf16.msra.mxu0 0
        %555 = vmatprep.subr.bf16.mxu0 0
        %556 = vmatpush2.bf16.msra.mxu0 0
        %557 = vmatprep.subr.bf16.mxu0 0
        %558 = vmatpush2.bf16.msra.mxu0 0
        %559 = vmatprep.subr.bf16.mxu0 0
        %560 = vmatpush2.bf16.msra.mxu0 0
        %561 = vmatprep.subr.bf16.mxu0 0
        %562 = vmatpush2.bf16.msra.mxu0 0
        %563 = vmatprep.mubr.bf16.mxu0 0
        %564 = vmatmul.mubr.bf16.gmra.mxu0 %v310
        %v565 = vpop.f32.mrf.mxu0
        %v566 = vadd.f32 0.0, %v565
        %v567 = vpop.f32.mrf.mxu0
        %v568 = vadd.f32 0.0, %v567
        %v569 = vpop.f32.mrf.mxu0
        %v570 = vadd.f32 0.0, %v569
        %v571 = vpop.f32.mrf.mxu0
        %v572 = vadd.f32 0.0, %v571
        %573 = vdwg.mxu0
        %v574 = vxor.u32 %v427, 2147483648
        %v575 = vxor.u32 %v429, 2147483648
        %v576 = vxor.u32 %v431, 2147483648
        %v577 = vxor.u32 %v433, 2147483648
        %v578 = vmul.f32 %v574, 1.442695
        %v579 = vpow.pop %v578
        %v580 = vmul.f32 %v575, 1.442695
        %v581 = vpow.pop %v580
        %v582 = vmul.f32 %v576, 1.442695
        %v583 = vpow.pop %v582
        %v584 = vmul.f32 %v577, 1.442695
        %v585 = vpow.pop %v584
        %v586 = vadd.f32 %v579, 1.0
        %v587 = vadd.f32 %v581, 1.0
        %v588 = vadd.f32 %v583, 1.0
        %v589 = vadd.f32 %v585, 1.0
        %v590 = vrcp.pop %v586
        %v591 = vmul.f32 1.0, %v590
        %v592 = vrcp.pop %v587
        %v593 = vmul.f32 1.0, %v592
        %v594 = vrcp.pop %v588
        %v595 = vmul.f32 1.0, %v594
        %v596 = vrcp.pop %v589
        %v597 = vmul.f32 1.0, %v596
        %v598 = vmul.f32 %v427, %v591
        %v599 = vmul.f32 %v429, %v593
        %v600 = vmul.f32 %v431, %v595
        %v601 = vmul.f32 %v433, %v597
        %v602 = vmul.f32 %v598, %v566
        %v603 = vmul.f32 %v599, %v568
        %v604 = vmul.f32 %v600, %v570
        %v605 = vmul.f32 %v601, %v572
        %v606 = vld [vmem:[#allocation2] sm:$0xff]
        %v607 = vld [vmem:[#allocation2 + $0x8] sm:$0xff]
        %v608 = vpack.c.bf16 %v604, %v602
        %v609 = vpack.c.bf16 %v605, %v603
        %v610 = vld [vmem:[%s245] sm:$0xf]
        %v611 = vld [vmem:[%s245 + $0x4] sm:$0xf]
        %v612 = vld [vmem:[%s245 + $0x8] sm:$0xf]
        %v613 = vld [vmem:[%s245 + $0xc] sm:$0xf]
        %v614 = vld [vmem:[%s245 + $0x10] sm:$0xf]
        %v615 = vld [vmem:[%s245 + $0x14] sm:$0xf]
        %v616 = vld [vmem:[%s245 + $0x18] sm:$0xf]
        %v617 = vld [vmem:[%s245 + $0x1c] sm:$0xf]
        %v618 = vld [vmem:[%s245 + $0x20] sm:$0xf]
        %v619 = vld [vmem:[%s245 + $0x24] sm:$0xf]
        %v620 = vld [vmem:[%s245 + $0x28] sm:$0xf]
        %v621 = vld [vmem:[%s245 + $0x2c] sm:$0xf]
        %v622 = vld [vmem:[%s245 + $0x30] sm:$0xf]
        %v623 = vld [vmem:[%s245 + $0x34] sm:$0xf]
        %v624 = vld [vmem:[%s245 + $0x38] sm:$0xf]
        %v625 = vld [vmem:[%s245 + $0x3c] sm:$0xf]
        %v626 = vld [vmem:[%s245 + $0x40] sm:$0xf]
        %v627 = vld [vmem:[%s245 + $0x44] sm:$0xf]
        %v628 = vld [vmem:[%s245 + $0x48] sm:$0xf]
        %v629 = vld [vmem:[%s245 + $0x4c] sm:$0xf]
        %v630 = vld [vmem:[%s245 + $0x50] sm:$0xf]
        %v631 = vld [vmem:[%s245 + $0x54] sm:$0xf]
        %v632 = vld [vmem:[%s245 + $0x58] sm:$0xf]
        %v633 = vld [vmem:[%s245 + $0x5c] sm:$0xf]
        %v634 = vld [vmem:[%s245 + $0x60] sm:$0xf]
        %v635 = vld [vmem:[%s245 + $0x64] sm:$0xf]
        %v636 = vld [vmem:[%s245 + $0x68] sm:$0xf]
        %v637 = vld [vmem:[%s245 + $0x6c] sm:$0xf]
        %v638 = vld [vmem:[%s245 + $0x70] sm:$0xf]
        %v639 = vld [vmem:[%s245 + $0x74] sm:$0xf]
        %v640 = vld [vmem:[%s245 + $0x78] sm:$0xf]
        %v641 = vld [vmem:[%s245 + $0x7c] sm:$0xf]
        %v674 = vunpack.c.l.b16 %v610
        %v675 = vunpack.c.l.b16 %v611
        %v676 = vunpack.c.l.b16 %v612
        %v677 = vunpack.c.l.b16 %v613
        %v678 = vunpack.c.l.b16 %v614
        %v679 = vunpack.c.l.b16 %v615
        %v680 = vunpack.c.l.b16 %v616
        %v681 = vunpack.c.l.b16 %v617
        %v682 = vunpack.c.l.b16 %v618
        %v683 = vunpack.c.l.b16 %v619
        %v684 = vunpack.c.l.b16 %v620
        %v685 = vunpack.c.l.b16 %v621
        %v686 = vunpack.c.l.b16 %v622
        %v687 = vunpack.c.l.b16 %v623
        %v688 = vunpack.c.l.b16 %v624
        %v689 = vunpack.c.l.b16 %v625
        %v690 = vunpack.c.l.b16 %v626
        %v691 = vunpack.c.l.b16 %v627
        %v692 = vunpack.c.l.b16 %v628
        %v693 = vunpack.c.l.b16 %v629
        %v694 = vunpack.c.l.b16 %v630
        %v695 = vunpack.c.l.b16 %v631
        %v696 = vunpack.c.l.b16 %v632
        %v697 = vunpack.c.l.b16 %v633
        %v698 = vunpack.c.l.b16 %v634
        %v699 = vunpack.c.l.b16 %v635
        %v700 = vunpack.c.l.b16 %v636
        %v701 = vunpack.c.l.b16 %v637
        %v702 = vunpack.c.l.b16 %v638
        %v703 = vunpack.c.l.b16 %v639
        %v704 = vunpack.c.l.b16 %v640
        %v705 = vunpack.c.l.b16 %v641
        %v706 = vpack.c.b16 %v675, %v674
        %v707 = vpack.c.b16 %v677, %v676
        %v708 = vpack.c.b16 %v679, %v678
        %v709 = vpack.c.b16 %v681, %v680
        %v710 = vpack.c.b16 %v683, %v682
        %v711 = vpack.c.b16 %v685, %v684
        %v712 = vpack.c.b16 %v687, %v686
        %v713 = vpack.c.b16 %v689, %v688
        %v714 = vpack.c.b16 %v691, %v690
        %v715 = vpack.c.b16 %v693, %v692
        %v716 = vpack.c.b16 %v695, %v694
        %v717 = vpack.c.b16 %v697, %v696
        %v718 = vpack.c.b16 %v699, %v698
        %v719 = vpack.c.b16 %v701, %v700
        %v720 = vpack.c.b16 %v703, %v702
        %v721 = vpack.c.b16 %v705, %v704
        %738 = vmatprep.subr.bf16.mxu0 0
        %739 = vmatpush1.bf16.msra.mxu0 %v713
        %740 = vmatprep.subr.bf16.mxu0 0
        %741 = vmatpush1.bf16.msra.mxu0 %v712
        %742 = vmatprep.subr.bf16.mxu0 0
        %743 = vmatpush1.bf16.msra.mxu0 %v711
        %744 = vmatprep.subr.bf16.mxu0 0
        %745 = vmatpush1.bf16.msra.mxu0 %v710
        %746 = vmatprep.subr.bf16.mxu0 0
        %747 = vmatpush1.bf16.msra.mxu0 %v709
        %748 = vmatprep.subr.bf16.mxu0 0
        %749 = vmatpush1.bf16.msra.mxu0 %v708
        %750 = vmatprep.subr.bf16.mxu0 0
        %751 = vmatpush1.bf16.msra.mxu0 %v707
        %752 = vmatprep.subr.bf16.mxu0 0
        %753 = vmatpush1.bf16.msra.mxu0 %v706
        %754 = vmatprep.subr.bf16.mxu0 0
        %755 = vmatpush2.bf16.msra.mxu0 %v721
        %756 = vmatprep.subr.bf16.mxu0 0
        %757 = vmatpush2.bf16.msra.mxu0 %v720
        %758 = vmatprep.subr.bf16.mxu0 0
        %759 = vmatpush2.bf16.msra.mxu0 %v719
        %760 = vmatprep.subr.bf16.mxu0 0
        %761 = vmatpush2.bf16.msra.mxu0 %v718
        %762 = vmatprep.subr.bf16.mxu0 0
        %763 = vmatpush2.bf16.msra.mxu0 %v717
        %764 = vmatprep.subr.bf16.mxu0 0
        %765 = vmatpush2.bf16.msra.mxu0 %v716
        %766 = vmatprep.subr.bf16.mxu0 0
        %767 = vmatpush2.bf16.msra.mxu0 %v715
        %768 = vmatprep.subr.bf16.mxu0 0
        %769 = vmatpush2.bf16.msra.mxu0 %v714
        %770 = vmatprep.mubr.bf16.mxu0 %v609
        %771 = vmatmul.mubr.bf16.gmra.mxu0 %v608
        %v772 = vpop.f32.mrf.mxu0
        %v773 = vadd.f32 0.0, %v772
        %v774 = vpop.f32.mrf.mxu0
        %v775 = vpop.f32.mrf.mxu0
        %v776 = vadd.f32 0.0, %v775
        %v777 = vpop.f32.mrf.mxu0
        %778 = vdwg.mxu0
        %v779 = vadd.f32 %v606, %v773
        %v780 = vadd.f32 %v607, %v776
        %781 = vst [vmem:[#allocation2] sm:$0xff] %v779
        %782 = vst [vmem:[#allocation2 + $0x8] sm:$0xff] %v780
        %p783 = scmp.eq.s32.totalorder %s28, 1
        // Predicated region
        $region49: #{tpu_custom_call.1} parent=31 // pred_check
          %p784 = pneg %p783
        $region50: #{tpu_custom_call.1} parent=31 // pred_check_branch
          %786 = sbr.rel (%p784) target = $region52
        $region51: #{tpu_custom_call.1} parent=31 // pred_region
          %v787 = vld [vmem:[#allocation2] sm:$0xff]
          %v788 = vld [vmem:[#allocation2 + $0x8] sm:$0xff]
          %789 = vst [vmem:[%s277] sm:$0xff] %v787
          %790 = vst [vmem:[%s277 + $0x8] sm:$0xff] %v788
        $region52: #{tpu_custom_call.1} parent=31 // pred_fallthru
          _
        %s791 = sand.u32 %s121, 1
        %s792 = scalar_lea.sflag [#allocation5], %s791
        %s793 = sand.u32 %s121, 1
        %s794 = smul.addr %s793, 16
        %s795 = scalar_lea.vmem [#allocation9], %s794
        // Predicated region
        $region53: #{tpu_custom_call.1} parent=31 // pred_check
          %p796 = pneg %p131
        $region54: #{tpu_custom_call.1} parent=31 // pred_check_branch
          %798 = sbr.rel (%p796) target = $region56
        $region55: #{tpu_custom_call.1} parent=31 // pred_region
          %s799 = smul.u32 2, %s27
          %s801 = ssub.s32 256, 256
          %802 = vsyncadd %s792, %s801
          %s803 = smul.addr %s799, 128
          %s804 = scalar_lea.hbm %s3, %s803
          %s805 = sshll.u32 %s795, 4
          %s806 = int_to_ptr.vmem [resolvable:$true] %s805
          %811 = dma.vmem_to_hbm [thread:$0]  %s806, 256, %s804, %s792, 128, 128, 8
        $region56: #{tpu_custom_call.1} parent=31 // pred_fallthru
          _
      $region32: #{tpu_custom_call.1} parent=5 // pred_fallthru
        _
      %p812 = scmp.le.s32.totalorder 2, %s18
      // Predicated region
      $region57: #{tpu_custom_call.1} parent=5 // pred_check
        %p813 = pneg %p812
      $region58: #{tpu_custom_call.1} parent=5 // pred_check_branch
        %815 = sbr.rel (%p813) target = $region60
      $region59: #{tpu_custom_call.1} parent=5 // pred_region
        %s816 = ssub.s32 %s18, 2
        // Predicated region
        $region61: #{tpu_custom_call.1} parent=59 // pred_check
          %p817 = pneg %p137
        $region62: #{tpu_custom_call.1} parent=59 // pred_check_branch
          %819 = sbr.rel (%p817) target = $region64
        $region63: #{tpu_custom_call.1} parent=59 // pred_region
          %s820 = sand.u32 %s122, 1
          %s821 = scalar_lea.sflag [#allocation5], %s820
          %s822 = sand.u32 %s122, 1
          %s823 = smul.addr %s822, 16
          %s824 = scalar_lea.vmem [#allocation9], %s823
          %825 = dma.done %s821, 256
        $region64: #{tpu_custom_call.1} parent=59 // pred_fallthru
          _
      $region60: #{tpu_custom_call.1} parent=5 // pred_fallthru
        _
    $region6: #{tpu_custom_call.1} parent=1 // loop_footer
      %s22 = sadd.s32 1, %s18
    $region7: #{tpu_custom_call.1} parent=1 // loop_footer_branch
      %17 = sbr.rel target = $region3
    $region8: #{tpu_custom_call.1} parent=1 // loop_exit
      _
    %826 = vsyncpa [#allocation4], 1
    %s827 = scalar_lea.sflag [#allocation4], 1
    %828 = vsyncpa %s827, 1
    %829 = vsyncpa [#allocation7], 1
    %s830 = scalar_lea.sflag [#allocation7], 1
    %831 = vsyncpa %s830, 1
    %832 = vsyncpa [#allocation5], 1
    %s833 = scalar_lea.sflag [#allocation5], 1
    %834 = vsyncpa %s833, 1

</llo_original>
